<compile_context>
chip_gen: v5e
topology: v5e:2x2
jax: 0.10.0
libtpu: 0.0.40
codegen_flags: <defaults>
</compile_context>

<pallas_src>
import math

import numpy as np
import jax
import jax.numpy as jnp
from jax.experimental import pallas as pl
from jax.experimental.pallas import tpu as pltpu


def _round_up(a, b):
    return ((a + b - 1) // b) * b


def _nerf_pe_kernel(n_coord, dc, odp):
    """Kernel factory. n_coord=C, dc=depth*C, odp=round_up(2*dc, 128)."""
    tail = odp - 2 * dc

    def kernel(x_ref, coef_ref, out_ref):
        # x_ref:    (TM, C)    normalized coords (f32)
        # coef_ref: (C, DC)    coef[c, k*C + c] = bases[k]*pi, zero elsewhere
        # out_ref:  (TM, ODp)  [ sin(phase) | cos(phase) | zero pad ]
        x = x_ref[...]
        coef = coef_ref[...]

        # Exact-f32 "replicate + scale" on the VPU (no MXU, no bf16 passes):
        # phase[:, k*C + c] = bases[k]*pi * x[:, c].  Only one nonzero term per
        # column, so adding the exact zeros keeps the value bit-exact f32.
        phase = x[:, 0:1] * coef[0:1, :]
        for c in range(1, n_coord):
            phase = phase + x[:, c:c + 1] * coef[c:c + 1, :]

        s = jnp.sin(phase)
        co = jnp.cos(phase)

        if dc % 128 == 0:
            # Both halves lane-aligned -> two full-width unmasked stores.
            out_ref[:, :dc] = s.astype(out_ref.dtype)
            out_ref[:, dc:] = co.astype(out_ref.dtype)
        else:
            # Assemble the [sin | cos | 0-pad] row in registers, one aligned store.
            row = jnp.concatenate([s, co], axis=1)
            if tail:
                row = jnp.concatenate(
                    [row, jnp.zeros((row.shape[0], tail), row.dtype)], axis=1)
            out_ref[...] = row.astype(out_ref.dtype)

    return kernel


def nerf_positional_encoding(inputs, axis=-1, depth=32, sine_type='lin_sine'):
    """JAX/Pallas equivalent of NerfPositionalEncoding.forward(inputs, axis)."""
    if sine_type == 'lin_sine':
        bases = np.arange(1, depth + 1, dtype=np.float64)
    elif sine_type == 'exp_sine':
        bases = 2.0 ** np.arange(depth, dtype=np.float64)
    else:
        raise ValueError(sine_type)

    x = jnp.asarray(inputs, dtype=jnp.float32)
    ax = axis % x.ndim

    # Move the concat axis last, flatten leading dims into rows.
    xm = jnp.moveaxis(x, ax, -1)
    lead_shape = xm.shape[:-1]
    C = xm.shape[-1]
    M = int(np.prod(lead_shape)) if lead_shape else 1
    x2 = xm.reshape(M, C)

    DC = depth * C
    ODp = _round_up(2 * DC, 128)   # single lane-padded output slab

    # Sparse replicate+scale coefficients (torch.cat ordering: base-major,
    # C contiguous coords per base).  f32 cast matches the reference's weak
    # python-float * f32 multiply.
    coef = np.zeros((C, DC), dtype=np.float32)
    cols = np.arange(C)
    for k in range(depth):
        coef[cols, k * C + cols] = np.float32(bases[k] * math.pi)
    coef = jnp.asarray(coef)

    # ---- generation-aware tiling ----
    try:
        info = pltpu.get_tpu_info()
        vmem_cap = int(getattr(info, "vmem_capacity_bytes", 128 * 1024 * 1024))
    except Exception:
        vmem_cap = 128 * 1024 * 1024
    # v5e/v6e: 128 MiB VMEM, 1 TensorCore.  v7x: 64 MiB per TC, 2 TCs/chip.
    num_tc = 2 if vmem_cap <= 64 * 1024 * 1024 else 1
    buf_budget = (vmem_cap * 3) // 8       # 48 MiB (v5e/v6e) / 24 MiB (v7x)
    vmem_limit = (vmem_cap * 3) // 4       # 96 MiB (v5e/v6e) / 48 MiB (v7x)

    # Per-row VMEM: double-buffered in/out pipeline tiles + in-kernel
    # temporaries (phase, sin, cos, assembled row).
    bytes_per_row = 4 * (2 * C + 3 * ODp + 4 * DC)
    rows_pad8 = _round_up(max(M, 1), 8)
    tm_budget = max(8, (buf_budget // bytes_per_row) // 8 * 8)
    TM = min(tm_budget, 8192, rows_pad8)

    n_steps = max(1, -(-M // TM))
    if num_tc > 1:
        # Even split across TensorCores on multi-TC parts; single-TC parts keep
        # the minimal step count (no pointless extra grid-step overhead).
        n_steps = _round_up(n_steps, num_tc)
    TM = max(8, _round_up(-(-M // n_steps), 8))
    pad_M = n_steps * TM

    if pad_M != M:
        x2 = jnp.pad(x2, ((0, pad_M - M), (0, 0)))

    out = pl.pallas_call(
        _nerf_pe_kernel(C, DC, ODp),
        out_shape=jax.ShapeDtypeStruct((pad_M, ODp), jnp.float32),
        grid_spec=pltpu.PrefetchScalarGridSpec(
            num_scalar_prefetch=0,
            grid=(n_steps,),
            in_specs=[
                pl.BlockSpec((TM, C), lambda i: (i, 0)),
                pl.BlockSpec((C, DC), lambda i: (0, 0)),
            ],
            out_specs=pl.BlockSpec((TM, ODp), lambda i: (i, 0)),
        ),
        compiler_params=pltpu.CompilerParams(
            dimension_semantics=("parallel",),
            vmem_limit_bytes=int(vmem_limit),
        ),
    )(x2, coef)

    # Depad with a single slice (no wrapper-side concatenate / extra HBM pass).
    out = out[:M, :2 * DC]
    out = out.reshape(lead_shape + (2 * DC,))
    out = jnp.moveaxis(out, -1, ax)
    # Reference asserts no NaNs; finite inputs give finite sin/cos here.
    return out


def _reference(x, axis, depth=32, sine_type='lin_sine'):
    if sine_type == 'lin_sine':
        bases = [i + 1 for i in range(depth)]
    else:
        bases = [2 ** i for i in range(depth)]
    parts = [jnp.sin(b * math.pi * x) for b in bases] + \
            [jnp.cos(b * math.pi * x) for b in bases]
    return jnp.concatenate(parts, axis=axis)


if __name__ == "__main__":
    # Case 1: batch=2, seq=16, coord dims=4; concat on last axis (DC=128, aligned path).
    x1 = jax.random.uniform(jax.random.PRNGKey(0), (2, 16, 4), dtype=jnp.float32)
    out1 = jax.block_until_ready(
        nerf_positional_encoding(x1, axis=-1, depth=32, sine_type='lin_sine'))
    assert out1.shape == (2, 16, 4 * 32 * 2), out1.shape
    ref1 = _reference(x1, axis=-1, depth=32)
    assert not bool(jnp.isnan(out1).any())
    err1 = float(jnp.max(jnp.abs(out1 - ref1)))
    assert err1 < 1e-4, err1

    # Case 2: concat on a middle axis with C=3 (exercises the unaligned/padded path).
    x2 = jax.random.uniform(jax.random.PRNGKey(1), (2, 3, 8), dtype=jnp.float32)
    out2 = jax.block_until_ready(
        nerf_positional_encoding(x2, axis=1, depth=32, sine_type='lin_sine'))
    assert out2.shape == (2, 3 * 32 * 2, 8), out2.shape
    ref2 = _reference(x2, axis=1, depth=32)
    err2 = float(jnp.max(jnp.abs(out2 - ref2)))
    assert err2 < 1e-4, err2

    # Case 3: exp_sine variant (exact-f32 VPU phase path, no MXU reconstruction).
    x3 = jax.random.uniform(jax.random.PRNGKey(0), (2, 16, 4), dtype=jnp.float32)
    out3 = jax.block_until_ready(
        nerf_positional_encoding(x3, axis=-1, depth=8, sine_type='exp_sine'))
    assert out3.shape == (2, 16, 4 * 8 * 2), out3.shape
    ref3 = _reference(x3, axis=-1, depth=8, sine_type='exp_sine')
    err3 = float(jnp.max(jnp.abs(out3 - ref3)))
    assert err3 < 1e-4, err3

    print("KERNEL_OK")
</pallas_src>

<mosaic_0001>
module attributes {stable_mosaic.version = 11 : i64} {
  func.func @kernel(%arg0: i32, %arg1: memref<32x4xf32, #tpu.memory_space<vmem>>, %arg2: memref<4x128xf32, #tpu.memory_space<vmem>>, %arg3: memref<32x256xf32, #tpu.memory_space<vmem>>) attributes {dimension_semantics = [#tpu.dimension_semantics<parallel>], iteration_bounds = array<i64: 1>, scalar_prefetch = 0 : i64, scratch_operands = 0 : i64, tpu.core_type = #tpu.core_type<tc>, window_params = [{transform_indices = @transform_0, window_bounds = array<i64: 32, 4>}, {pipeline_mode = #tpu.pipeline_mode<synchronous>, transform_indices = @transform_1, window_bounds = array<i64: 4, 128>}, {transform_indices = @transform_2, window_bounds = array<i64: 32, 256>}]} {
    %c0 = arith.constant 0 : index
    %c0_0 = arith.constant 0 : index
    %0 = vector.load %arg1[%c0, %c0_0] : memref<32x4xf32, #tpu.memory_space<vmem>>, vector<32x4xf32>
    %c0_1 = arith.constant 0 : index
    %c0_2 = arith.constant 0 : index
    %1 = vector.load %arg2[%c0_1, %c0_2] : memref<4x128xf32, #tpu.memory_space<vmem>>, vector<4x128xf32>
    %2 = vector.extract_strided_slice %0 {offsets = [0, 0], sizes = [32, 1], strides = [1, 1]} : vector<32x4xf32> to vector<32x1xf32>
    %3 = vector.extract_strided_slice %1 {offsets = [0, 0], sizes = [1, 128], strides = [1, 1]} : vector<4x128xf32> to vector<1x128xf32>
    %4 = vector.broadcast %2 : vector<32x1xf32> to vector<32x128xf32>
    %5 = vector.broadcast %3 : vector<1x128xf32> to vector<32x128xf32>
    %6 = arith.mulf %4, %5 : vector<32x128xf32>
    %7 = vector.extract_strided_slice %0 {offsets = [0, 1], sizes = [32, 1], strides = [1, 1]} : vector<32x4xf32> to vector<32x1xf32>
    %8 = vector.extract_strided_slice %1 {offsets = [1, 0], sizes = [1, 128], strides = [1, 1]} : vector<4x128xf32> to vector<1x128xf32>
    %9 = vector.broadcast %7 : vector<32x1xf32> to vector<32x128xf32>
    %10 = vector.broadcast %8 : vector<1x128xf32> to vector<32x128xf32>
    %11 = arith.mulf %9, %10 : vector<32x128xf32>
    %12 = arith.addf %6, %11 : vector<32x128xf32>
    %13 = vector.extract_strided_slice %0 {offsets = [0, 2], sizes = [32, 1], strides = [1, 1]} : vector<32x4xf32> to vector<32x1xf32>
    %14 = vector.extract_strided_slice %1 {offsets = [2, 0], sizes = [1, 128], strides = [1, 1]} : vector<4x128xf32> to vector<1x128xf32>
    %15 = vector.broadcast %13 : vector<32x1xf32> to vector<32x128xf32>
    %16 = vector.broadcast %14 : vector<1x128xf32> to vector<32x128xf32>
    %17 = arith.mulf %15, %16 : vector<32x128xf32>
    %18 = arith.addf %12, %17 : vector<32x128xf32>
    %19 = vector.extract_strided_slice %0 {offsets = [0, 3], sizes = [32, 1], strides = [1, 1]} : vector<32x4xf32> to vector<32x1xf32>
    %20 = vector.extract_strided_slice %1 {offsets = [3, 0], sizes = [1, 128], strides = [1, 1]} : vector<4x128xf32> to vector<1x128xf32>
    %21 = vector.broadcast %19 : vector<32x1xf32> to vector<32x128xf32>
    %22 = vector.broadcast %20 : vector<1x128xf32> to vector<32x128xf32>
    %23 = arith.mulf %21, %22 : vector<32x128xf32>
    %24 = arith.addf %18, %23 : vector<32x128xf32>
    %25 = math.sin %24 : vector<32x128xf32>
    %26 = math.cos %24 : vector<32x128xf32>
    %c0_3 = arith.constant 0 : index
    %c0_4 = arith.constant 0 : index
    %27 = vector.load %arg3[%c0_3, %c0_4] : memref<32x256xf32, #tpu.memory_space<vmem>>, vector<32x128xf32>
    tpu.vector_store %arg3[%c0_3, %c0_4], %25 {strides = array<i32>} : memref<32x256xf32, #tpu.memory_space<vmem>>, vector<32x128xf32>,
    %c0_5 = arith.constant 0 : index
    %c128 = arith.constant 128 : index
    %28 = vector.load %arg3[%c0_5, %c128] : memref<32x256xf32, #tpu.memory_space<vmem>>, vector<32x128xf32>
    tpu.vector_store %arg3[%c0_5, %c128], %26 {strides = array<i32>} : memref<32x256xf32, #tpu.memory_space<vmem>>, vector<32x128xf32>,
    return
  }
  func.func @transform_0(%arg0: i32) -> (i32, i32) {
    %c0_i32 = arith.constant 0 : i32
    %c0_i32_0 = arith.constant 0 : i32
    return %arg0, %c0_i32 : i32, i32
  }
  func.func @transform_1(%arg0: i32) -> (i32, i32) {
    %c0_i32 = arith.constant 0 : i32
    %c0_i32_0 = arith.constant 0 : i32
    %c0_i32_1 = arith.constant 0 : i32
    return %c0_i32, %c0_i32_0 : i32, i32
  }
  func.func @transform_2(%arg0: i32) -> (i32, i32) {
    %c0_i32 = arith.constant 0 : i32
    %c0_i32_0 = arith.constant 0 : i32
    return %arg0, %c0_i32 : i32, i32
  }
}

</mosaic_0001>

<llo_original>
// kernel: tpu_custom_call.1
$region0: #{tpu_custom_call.1}
  #allocation0 [shape = 'u32[]', space=smem, size = 0x4, offset = 0x4, fixed_abs, tag = 'smem constant byte address 0x4 - core index']
  #allocation1 [shape = 'u32[72,128]{1,0:T(1,128)}', space=vmem, size = 0x9000, scoped, tag = 'internal scratch']
  %s0 = inlined_call_operand.vmem [shape: f32[32,4], index: 0, kind: input, shape index: {}]
  %s1 = inlined_call_operand.vmem [shape: f32[4,128], index: 1, kind: input, shape index: {}]
  %s2 = inlined_call_operand.hbm [shape: f32[32,256], index: 2, kind: output, shape index: {}]
  %s3 = sld [smem:[#allocation0]]
  $region18: #{tpu_custom_call.1} parent=0
    _
  %s5 = ssub.s32 1, %s3
  %s6 = scalar_select 0, %s5, %s3
  $region1: #{tpu_custom_call.1} parent=0
    #allocation2 [shape = 'u8[32768]{0}', space=vmem, size = 0x8000, scoped, tag = 'output window, operand 0, single buffered']
    #allocation3 [shape = 's32[1]{0}', space=sflag, size = 0x4, scoped, tag = 'scoped memory for tpu_custom_call.1']
    %7 = vsyncpa [#allocation3], 0
    // Predicated region
    $region2: #{tpu_custom_call.1} parent=1 // pred_check
      _
    $region3: #{tpu_custom_call.1} parent=1 // pred_check_branch
      %9 = sbr.rel (0) target = $region5
    $region4: #{tpu_custom_call.1} parent=1 // pred_region
      _
    $region5: #{tpu_custom_call.1} parent=1 // pred_fallthru
      _
    // Predicated region
    $region6: #{tpu_custom_call.1} parent=1 // pred_check
      _
    $region7: #{tpu_custom_call.1} parent=1 // pred_check_branch
      %11 = sbr.rel (0) target = $region9
    $region8: #{tpu_custom_call.1} parent=1 // pred_region
      _
    $region9: #{tpu_custom_call.1} parent=1 // pred_fallthru
      _
    %v12 = vld [vmem:[%s0] sm:$0xff]
    %v13 = vld [vmem:[%s0 + $0x8] sm:$0xff]
    %v14 = vld [vmem:[%s0 + $0x10] sm:$0xff]
    %v15 = vld [vmem:[%s0 + $0x18] sm:$0xff]
    %v16 = vld [vmem:[%s1] sm:$0xf]
    %18 = vset.pattern.permute.xlu0 0
    %19 = vperm.xlu0 %18, %v12
    %v20 = vpop.permute.xlu0 %19
    %23 = vset.pattern.permute.xlu0 0
    %24 = vperm.xlu0 %23, %v13
    %v25 = vpop.permute.xlu0 %24
    %28 = vset.pattern.permute.xlu0 0
    %29 = vperm.xlu0 %28, %v14
    %v30 = vpop.permute.xlu0 %29
    %33 = vset.pattern.permute.xlu0 0
    %34 = vperm.xlu0 %33, %v15
    %v35 = vpop.permute.xlu0 %34
    %v37 = vperm.slane %v16, 0
    %v38 = vmul.f32 %v20, %v37
    %v39 = vmul.f32 %v25, %v37
    %v40 = vmul.f32 %v30, %v37
    %v41 = vmul.f32 %v35, %v37
    %42 = vset.pattern.permute.xlu0 1
    %43 = vperm.xlu0 %42, %v12
    %v44 = vpop.permute.xlu0 %43
    %46 = vset.pattern.permute.xlu0 1
    %47 = vperm.xlu0 %46, %v13
    %v48 = vpop.permute.xlu0 %47
    %50 = vset.pattern.permute.xlu0 1
    %51 = vperm.xlu0 %50, %v14
    %v52 = vpop.permute.xlu0 %51
    %54 = vset.pattern.permute.xlu0 1
    %55 = vperm.xlu0 %54, %v15
    %v56 = vpop.permute.xlu0 %55
    %v58 = vperm.slane %v16, 1
    %v59 = vmul.f32 %v44, %v58
    %v60 = vmul.f32 %v48, %v58
    %v61 = vmul.f32 %v52, %v58
    %v62 = vmul.f32 %v56, %v58
    %v63 = vadd.f32 %v38, %v59
    %v64 = vadd.f32 %v39, %v60
    %v65 = vadd.f32 %v40, %v61
    %v66 = vadd.f32 %v41, %v62
    %67 = vset.pattern.permute.xlu0 2
    %68 = vperm.xlu0 %67, %v12
    %v69 = vpop.permute.xlu0 %68
    %71 = vset.pattern.permute.xlu0 2
    %72 = vperm.xlu0 %71, %v13
    %v73 = vpop.permute.xlu0 %72
    %75 = vset.pattern.permute.xlu0 2
    %76 = vperm.xlu0 %75, %v14
    %v77 = vpop.permute.xlu0 %76
    %79 = vset.pattern.permute.xlu0 2
    %80 = vperm.xlu0 %79, %v15
    %v81 = vpop.permute.xlu0 %80
    %v83 = vperm.slane %v16, 2
    %v84 = vmul.f32 %v69, %v83
    %v85 = vmul.f32 %v73, %v83
    %v86 = vmul.f32 %v77, %v83
    %v87 = vmul.f32 %v81, %v83
    %v88 = vadd.f32 %v63, %v84
    %v89 = vadd.f32 %v64, %v85
    %v90 = vadd.f32 %v65, %v86
    %v91 = vadd.f32 %v66, %v87
    %92 = vset.pattern.permute.xlu0 3
    %93 = vperm.xlu0 %92, %v12
    %v94 = vpop.permute.xlu0 %93
    %96 = vset.pattern.permute.xlu0 3
    %97 = vperm.xlu0 %96, %v13
    %v98 = vpop.permute.xlu0 %97
    %100 = vset.pattern.permute.xlu0 3
    %101 = vperm.xlu0 %100, %v14
    %v102 = vpop.permute.xlu0 %101
    %104 = vset.pattern.permute.xlu0 3
    %105 = vperm.xlu0 %104, %v15
    %v106 = vpop.permute.xlu0 %105
    %v108 = vperm.slane %v16, 3
    %v109 = vmul.f32 %v94, %v108
    %v110 = vmul.f32 %v98, %v108
    %v111 = vmul.f32 %v102, %v108
    %v112 = vmul.f32 %v106, %v108
    %v113 = vadd.f32 %v88, %v109
    %v114 = vadd.f32 %v89, %v110
    %v115 = vadd.f32 %v90, %v111
    %v116 = vadd.f32 %v91, %v112
    %v117 = vand.u32 2147483647, %v113
    %vm118 = vcmp.le.f32.partialorder %v117, 0.7853982
    %vm119 = vcmp.lt.s32.totalorder %v113, 0
    %v120 = vand.u32 %v113, 2139095040
    %v121 = vshrl.u32 %v120, 23
    %v122 = vsub.s32 %v121, 127
    %v123 = vand.u32 2147483647, %v113
    %v124 = vand.u32 %v123, 8388607
    %v125 = vor.u32 %v124, 8388608
    %v126 = vsub.s32 0, %v125
    %v127 = vadd.s32 %v122, 1
    %vm128 = vcmp.gt.s32.totalorder %v127, 0
    %v129 = vsel %vm128, %v127, 0
    %v130 = vshrl.u32 %v129, 5
    %v131 = vand.u32 %v129, 31
    %v132 = vsub.s32 32, %v131
    %v133 = vshrl.u32 683565275, %v132
    %v134 = vshll.u32 683565275, %v131
    %v135 = vshrl.u32 2475754826, %v132
    %v136 = vor.u32 %v134, %v135
    %v137 = vshll.u32 2475754826, %v131
    %v138 = vshrl.u32 2131351028, %v132
    %v139 = vor.u32 %v137, %v138
    %v140 = vshll.u32 2131351028, %v131
    %v141 = vshrl.u32 2102212464, %v132
    %v142 = vor.u32 %v140, %v141
    %v143 = vshll.u32 2102212464, %v131
    %v144 = vshrl.u32 920167782, %v132
    %v145 = vor.u32 %v143, %v144
    %v146 = vshll.u32 920167782, %v131
    %v147 = vshrl.u32 1326507024, %v132
    %v148 = vor.u32 %v146, %v147
    %vm149 = vcmp.lt.s32.totalorder %v130, 1
    %vm150 = vcmp.lt.s32.totalorder %v130, 2
    %vm151 = vcmp.lt.s32.totalorder %v130, 3
    %vm152 = vcmp.lt.s32.totalorder %v130, 4
    %v153 = vsel %vm149, %v133, %v136
    %v154 = vsel %vm152, %v142, 2102212464
    %v155 = vsel %vm151, %v139, %v154
    %v156 = vsel %vm150, %v153, %v155
    %v157 = vsel %vm149, %v136, %v139
    %v158 = vsel %vm152, %v145, 920167782
    %v159 = vsel %vm151, %v142, %v158
    %v160 = vsel %vm150, %v157, %v159
    %v161 = vsel %vm149, %v139, %v142
    %v162 = vsel %vm152, %v148, 1326507024
    %v163 = vsel %vm151, %v145, %v162
    %v164 = vsel %vm150, %v161, %v163
    %v165 = vshll.u32 %v125, 8
    %v166 = vand.u32 %v165, 65535
    %v167 = vshrl.u32 %v165, 16
    %v168 = vand.u32 %v164, 65535
    %v169 = vshrl.u32 %v164, 16
    %v170 = vmul.u32 %v166, %v168
    %v171 = vmul.u32 %v166, %v169
    %v172 = vmul.u32 %v167, %v168
    %v173 = vmul.u32 %v167, %v169
    %v174 = vshll.u32 %v171, 16
    %v175 = vshrl.u32 %v171, 16
    %v176 = vshll.u32 %v172, 16
    %v177 = vshrl.u32 %v172, 16
    %vm178 = vc.u32 %v170, %v174
    %v179 = vsel %vm178, 1, 0
    %v180 = vadd.s32 %v170, %v174
    %v181 = vadd.s32 %v173, %v179
    %vm182 = vc.u32 %v180, %v176
    %v183 = vsel %vm182, 1, 0
    %v184 = vadd.s32 %v180, %v176
    %v185 = vadd.s32 %v181, %v183
    %v186 = vadd.s32 %v185, %v175
    %v187 = vadd.s32 %v186, %v177
    %v188 = vand.u32 %v165, 65535
    %v189 = vshrl.u32 %v165, 16
    %v190 = vand.u32 %v160, 65535
    %v191 = vshrl.u32 %v160, 16
    %v192 = vmul.u32 %v188, %v190
    %v193 = vmul.u32 %v188, %v191
    %v194 = vmul.u32 %v189, %v190
    %v195 = vmul.u32 %v189, %v191
    %v196 = vshll.u32 %v193, 16
    %v197 = vshrl.u32 %v193, 16
    %v198 = vshll.u32 %v194, 16
    %v199 = vshrl.u32 %v194, 16
    %vm200 = vc.u32 %v192, %v196
    %v201 = vsel %vm200, 1, 0
    %v202 = vadd.s32 %v192, %v196
    %v203 = vadd.s32 %v195, %v201
    %vm204 = vc.u32 %v202, %v198
    %v205 = vsel %vm204, 1, 0
    %v206 = vadd.s32 %v202, %v198
    %v207 = vadd.s32 %v203, %v205
    %v208 = vadd.s32 %v207, %v197
    %v209 = vadd.s32 %v208, %v199
    %v210 = vmul.u32 %v165, %v156
    %v211 = vadd.s32 %v187, %v206
    %vm212 = vc.u32 %v187, %v206
    %v213 = vadd.s32 %v209, 1
    %v214 = vsel %vm212, %v213, %v209
    %v215 = vadd.s32 %v210, %v214
    %v216 = vadd.s32 %v215, 536870912
    %v217 = vshrl.u32 %v216, 30
    %v218 = vshll.u32 %v217, 30
    %v219 = vsub.s32 %v215, %v218
    %vm220 = vcmp.lt.s32.totalorder %v219, 0
    %v221 = vsub.s32 0, %v219
    %v222 = vsel %vm220, %v221, %v219
    %v223 = vclz %v222
    %v224 = vsub.s32 %v223, 2
    %vm225 = vcmp.gt.s32.totalorder 0, %v224
    %v226 = vsel %vm225, 0, %v224
    %v227 = vsub.s32 32, %v226
    %v228 = vshll.u32 %v219, %v226
    %v229 = vshrl.u32 %v211, %v227
    %v230 = vor.u32 %v228, %v229
    %v231 = vsub.s32 4294967266, %v226
    %v232 = vadd.s32 %v231, 127
    %v233 = vshll.u32 %v232, 23
    %v234 = vor.u32 4788187, %v233
    %v235 = vand.u32 2147483647, %v234
    %v237 = vcvt.s32.f32 %v230
    %v238 = vmul.f32 %v237, %v235
    %v239 = vxor.u32 %v238, 2147483648
    %v240 = vsel %vm119, %v239, %v238
    %v241 = vsub.s32 4, %v217
    %v242 = vsel %vm119, %v241, %v217
    %v243 = vsel %vm118, %v113, %v240
    %v244 = vsel %vm118, 0, %v242
    %v245 = vmul.f32 %v243, %v243
    %v246 = vmul.f32 %v245, -0.001358992
    %v247 = vadd.f32 %v246, 0.041655596
    %v248 = vmul.f32 %v245, %v247
    %v249 = vadd.f32 %v248, -0.4999988
    %v250 = vmul.f32 %v245, %v249
    %v251 = vadd.f32 1.0, %v250
    %v252 = vmul.f32 %v243, %v243
    %v253 = vmul.f32 %v252, -0.00019511016
    %v254 = vadd.f32 %v253, 0.008332121
    %v255 = vmul.f32 %v252, %v254
    %v256 = vadd.f32 %v255, -0.16666654
    %v257 = vmul.f32 %v252, %v256
    %v258 = vadd.f32 %v257, 1.0
    %v259 = vmul.f32 %v258, %v243
    %vm260 = vweird.f32 %v113
    %v261 = vadd.s32 %v244, 3
    %v262 = vand.u32 %v261, 3
    %vm263 = vcmp.lt.s32.totalorder %v262, 2
    %vm264 = vcmp.eq.s32.totalorder %v262, 0
    %v265 = vxor.u32 %v259, 2147483648
    %v266 = vsel %vm264, %v251, %v265
    %vm267 = vcmp.eq.s32.totalorder %v262, 2
    %v268 = vxor.u32 %v251, 2147483648
    %v269 = vsel %vm267, %v268, %v259
    %v270 = vsel %vm263, %v266, %v269
    %v271 = vsel %vm260, nan, %v270
    %v272 = vand.u32 2147483647, %v114
    %vm273 = vcmp.le.f32.partialorder %v272, 0.7853982
    %vm274 = vcmp.lt.s32.totalorder %v114, 0
    %v275 = vand.u32 %v114, 2139095040
    %v276 = vshrl.u32 %v275, 23
    %v277 = vsub.s32 %v276, 127
    %v278 = vand.u32 2147483647, %v114
    %v279 = vand.u32 %v278, 8388607
    %v280 = vor.u32 %v279, 8388608
    %v281 = vsub.s32 0, %v280
    %v282 = vadd.s32 %v277, 1
    %vm283 = vcmp.gt.s32.totalorder %v282, 0
    %v284 = vsel %vm283, %v282, 0
    %v285 = vshrl.u32 %v284, 5
    %v286 = vand.u32 %v284, 31
    %v287 = vsub.s32 32, %v286
    %v288 = vshrl.u32 683565275, %v287
    %v289 = vshll.u32 683565275, %v286
    %v290 = vshrl.u32 2475754826, %v287
    %v291 = vor.u32 %v289, %v290
    %v292 = vshll.u32 2475754826, %v286
    %v293 = vshrl.u32 2131351028, %v287
    %v294 = vor.u32 %v292, %v293
    %v295 = vshll.u32 2131351028, %v286
    %v296 = vshrl.u32 2102212464, %v287
    %v297 = vor.u32 %v295, %v296
    %v298 = vshll.u32 2102212464, %v286
    %v299 = vshrl.u32 920167782, %v287
    %v300 = vor.u32 %v298, %v299
    %v301 = vshll.u32 920167782, %v286
    %v302 = vshrl.u32 1326507024, %v287
    %v303 = vor.u32 %v301, %v302
    %vm304 = vcmp.lt.s32.totalorder %v285, 1
    %vm305 = vcmp.lt.s32.totalorder %v285, 2
    %vm306 = vcmp.lt.s32.totalorder %v285, 3
    %vm307 = vcmp.lt.s32.totalorder %v285, 4
    %v308 = vsel %vm304, %v288, %v291
    %v309 = vsel %vm307, %v297, 2102212464
    %v310 = vsel %vm306, %v294, %v309
    %v311 = vsel %vm305, %v308, %v310
    %v312 = vsel %vm304, %v291, %v294
    %v313 = vsel %vm307, %v300, 920167782
    %v314 = vsel %vm306, %v297, %v313
    %v315 = vsel %vm305, %v312, %v314
    %v316 = vsel %vm304, %v294, %v297
    %v317 = vsel %vm307, %v303, 1326507024
    %v318 = vsel %vm306, %v300, %v317
    %v319 = vsel %vm305, %v316, %v318
    %v320 = vshll.u32 %v280, 8
    %v321 = vand.u32 %v320, 65535
    %v322 = vshrl.u32 %v320, 16
    %v323 = vand.u32 %v319, 65535
    %v324 = vshrl.u32 %v319, 16
    %v325 = vmul.u32 %v321, %v323
    %v326 = vmul.u32 %v321, %v324
    %v327 = vmul.u32 %v322, %v323
    %v328 = vmul.u32 %v322, %v324
    %v329 = vshll.u32 %v326, 16
    %v330 = vshrl.u32 %v326, 16
    %v331 = vshll.u32 %v327, 16
    %v332 = vshrl.u32 %v327, 16
    %vm333 = vc.u32 %v325, %v329
    %v334 = vsel %vm333, 1, 0
    %v335 = vadd.s32 %v325, %v329
    %v336 = vadd.s32 %v328, %v334
    %vm337 = vc.u32 %v335, %v331
    %v338 = vsel %vm337, 1, 0
    %v339 = vadd.s32 %v335, %v331
    %v340 = vadd.s32 %v336, %v338
    %v341 = vadd.s32 %v340, %v330
    %v342 = vadd.s32 %v341, %v332
    %v343 = vand.u32 %v320, 65535
    %v344 = vshrl.u32 %v320, 16
    %v345 = vand.u32 %v315, 65535
    %v346 = vshrl.u32 %v315, 16
    %v347 = vmul.u32 %v343, %v345
    %v348 = vmul.u32 %v343, %v346
    %v349 = vmul.u32 %v344, %v345
    %v350 = vmul.u32 %v344, %v346
    %v351 = vshll.u32 %v348, 16
    %v352 = vshrl.u32 %v348, 16
    %v353 = vshll.u32 %v349, 16
    %v354 = vshrl.u32 %v349, 16
    %vm355 = vc.u32 %v347, %v351
    %v356 = vsel %vm355, 1, 0
    %v357 = vadd.s32 %v347, %v351
    %v358 = vadd.s32 %v350, %v356
    %vm359 = vc.u32 %v357, %v353
    %v360 = vsel %vm359, 1, 0
    %v361 = vadd.s32 %v357, %v353
    %v362 = vadd.s32 %v358, %v360
    %v363 = vadd.s32 %v362, %v352
    %v364 = vadd.s32 %v363, %v354
    %v365 = vmul.u32 %v320, %v311
    %v366 = vadd.s32 %v342, %v361
    %vm367 = vc.u32 %v342, %v361
    %v368 = vadd.s32 %v364, 1
    %v369 = vsel %vm367, %v368, %v364
    %v370 = vadd.s32 %v365, %v369
    %v371 = vadd.s32 %v370, 536870912
    %v372 = vshrl.u32 %v371, 30
    %v373 = vshll.u32 %v372, 30
    %v374 = vsub.s32 %v370, %v373
    %vm375 = vcmp.lt.s32.totalorder %v374, 0
    %v376 = vsub.s32 0, %v374
    %v377 = vsel %vm375, %v376, %v374
    %v378 = vclz %v377
    %v379 = vsub.s32 %v378, 2
    %vm380 = vcmp.gt.s32.totalorder 0, %v379
    %v381 = vsel %vm380, 0, %v379
    %v382 = vsub.s32 32, %v381
    %v383 = vshll.u32 %v374, %v381
    %v384 = vshrl.u32 %v366, %v382
    %v385 = vor.u32 %v383, %v384
    %v386 = vsub.s32 4294967266, %v381
    %v387 = vadd.s32 %v386, 127
    %v388 = vshll.u32 %v387, 23
    %v389 = vor.u32 4788187, %v388
    %v390 = vand.u32 2147483647, %v389
    %v392 = vcvt.s32.f32 %v385
    %v393 = vmul.f32 %v392, %v390
    %v394 = vxor.u32 %v393, 2147483648
    %v395 = vsel %vm274, %v394, %v393
    %v396 = vsub.s32 4, %v372
    %v397 = vsel %vm274, %v396, %v372
    %v398 = vsel %vm273, %v114, %v395
    %v399 = vsel %vm273, 0, %v397
    %v400 = vmul.f32 %v398, %v398
    %v401 = vmul.f32 %v400, -0.001358992
    %v402 = vadd.f32 %v401, 0.041655596
    %v403 = vmul.f32 %v400, %v402
    %v404 = vadd.f32 %v403, -0.4999988
    %v405 = vmul.f32 %v400, %v404
    %v406 = vadd.f32 1.0, %v405
    %v407 = vmul.f32 %v398, %v398
    %v408 = vmul.f32 %v407, -0.00019511016
    %v409 = vadd.f32 %v408, 0.008332121
    %v410 = vmul.f32 %v407, %v409
    %v411 = vadd.f32 %v410, -0.16666654
    %v412 = vmul.f32 %v407, %v411
    %v413 = vadd.f32 %v412, 1.0
    %v414 = vmul.f32 %v413, %v398
    %vm415 = vweird.f32 %v114
    %v416 = vadd.s32 %v399, 3
    %v417 = vand.u32 %v416, 3
    %vm418 = vcmp.lt.s32.totalorder %v417, 2
    %vm419 = vcmp.eq.s32.totalorder %v417, 0
    %v420 = vxor.u32 %v414, 2147483648
    %v421 = vsel %vm419, %v406, %v420
    %vm422 = vcmp.eq.s32.totalorder %v417, 2
    %v423 = vxor.u32 %v406, 2147483648
    %v424 = vsel %vm422, %v423, %v414
    %v425 = vsel %vm418, %v421, %v424
    %v426 = vsel %vm415, nan, %v425
    %v427 = vand.u32 2147483647, %v115
    %vm428 = vcmp.le.f32.partialorder %v427, 0.7853982
    %vm429 = vcmp.lt.s32.totalorder %v115, 0
    %v430 = vand.u32 %v115, 2139095040
    %v431 = vshrl.u32 %v430, 23
    %v432 = vsub.s32 %v431, 127
    %v433 = vand.u32 2147483647, %v115
    %v434 = vand.u32 %v433, 8388607
    %v435 = vor.u32 %v434, 8388608
    %v436 = vsub.s32 0, %v435
    %v437 = vadd.s32 %v432, 1
    %vm438 = vcmp.gt.s32.totalorder %v437, 0
    %v439 = vsel %vm438, %v437, 0
    %v440 = vshrl.u32 %v439, 5
    %v441 = vand.u32 %v439, 31
    %v442 = vsub.s32 32, %v441
    %v443 = vshrl.u32 683565275, %v442
    %v444 = vshll.u32 683565275, %v441
    %v445 = vshrl.u32 2475754826, %v442
    %v446 = vor.u32 %v444, %v445
    %v447 = vshll.u32 2475754826, %v441
    %v448 = vshrl.u32 2131351028, %v442
    %v449 = vor.u32 %v447, %v448
    %v450 = vshll.u32 2131351028, %v441
    %v451 = vshrl.u32 2102212464, %v442
    %v452 = vor.u32 %v450, %v451
    %v453 = vshll.u32 2102212464, %v441
    %v454 = vshrl.u32 920167782, %v442
    %v455 = vor.u32 %v453, %v454
    %v456 = vshll.u32 920167782, %v441
    %v457 = vshrl.u32 1326507024, %v442
    %v458 = vor.u32 %v456, %v457
    %vm459 = vcmp.lt.s32.totalorder %v440, 1
    %vm460 = vcmp.lt.s32.totalorder %v440, 2
    %vm461 = vcmp.lt.s32.totalorder %v440, 3
    %vm462 = vcmp.lt.s32.totalorder %v440, 4
    %v463 = vsel %vm459, %v443, %v446
    %v464 = vsel %vm462, %v452, 2102212464
    %v465 = vsel %vm461, %v449, %v464
    %v466 = vsel %vm460, %v463, %v465
    %v467 = vsel %vm459, %v446, %v449
    %v468 = vsel %vm462, %v455, 920167782
    %v469 = vsel %vm461, %v452, %v468
    %v470 = vsel %vm460, %v467, %v469
    %v471 = vsel %vm459, %v449, %v452
    %v472 = vsel %vm462, %v458, 1326507024
    %v473 = vsel %vm461, %v455, %v472
    %v474 = vsel %vm460, %v471, %v473
    %v475 = vshll.u32 %v435, 8
    %v476 = vand.u32 %v475, 65535
    %v477 = vshrl.u32 %v475, 16
    %v478 = vand.u32 %v474, 65535
    %v479 = vshrl.u32 %v474, 16
    %v480 = vmul.u32 %v476, %v478
    %v481 = vmul.u32 %v476, %v479
    %v482 = vmul.u32 %v477, %v478
    %v483 = vmul.u32 %v477, %v479
    %v484 = vshll.u32 %v481, 16
    %v485 = vshrl.u32 %v481, 16
    %v486 = vshll.u32 %v482, 16
    %v487 = vshrl.u32 %v482, 16
    %vm488 = vc.u32 %v480, %v484
    %v489 = vsel %vm488, 1, 0
    %v490 = vadd.s32 %v480, %v484
    %v491 = vadd.s32 %v483, %v489
    %vm492 = vc.u32 %v490, %v486
    %v493 = vsel %vm492, 1, 0
    %v494 = vadd.s32 %v490, %v486
    %v495 = vadd.s32 %v491, %v493
    %v496 = vadd.s32 %v495, %v485
    %v497 = vadd.s32 %v496, %v487
    %v498 = vand.u32 %v475, 65535
    %v499 = vshrl.u32 %v475, 16
    %v500 = vand.u32 %v470, 65535
    %v501 = vshrl.u32 %v470, 16
    %v502 = vmul.u32 %v498, %v500
    %v503 = vmul.u32 %v498, %v501
    %v504 = vmul.u32 %v499, %v500
    %v505 = vmul.u32 %v499, %v501
    %v506 = vshll.u32 %v503, 16
    %v507 = vshrl.u32 %v503, 16
    %v508 = vshll.u32 %v504, 16
    %v509 = vshrl.u32 %v504, 16
    %vm510 = vc.u32 %v502, %v506
    %v511 = vsel %vm510, 1, 0
    %v512 = vadd.s32 %v502, %v506
    %v513 = vadd.s32 %v505, %v511
    %vm514 = vc.u32 %v512, %v508
    %v515 = vsel %vm514, 1, 0
    %v516 = vadd.s32 %v512, %v508
    %v517 = vadd.s32 %v513, %v515
    %v518 = vadd.s32 %v517, %v507
    %v519 = vadd.s32 %v518, %v509
    %v520 = vmul.u32 %v475, %v466
    %v521 = vadd.s32 %v497, %v516
    %vm522 = vc.u32 %v497, %v516
    %v523 = vadd.s32 %v519, 1
    %v524 = vsel %vm522, %v523, %v519
    %v525 = vadd.s32 %v520, %v524
    %v526 = vadd.s32 %v525, 536870912
    %v527 = vshrl.u32 %v526, 30
    %v528 = vshll.u32 %v527, 30
    %v529 = vsub.s32 %v525, %v528
    %vm530 = vcmp.lt.s32.totalorder %v529, 0
    %v531 = vsub.s32 0, %v529
    %v532 = vsel %vm530, %v531, %v529
    %v533 = vclz %v532
    %v534 = vsub.s32 %v533, 2
    %vm535 = vcmp.gt.s32.totalorder 0, %v534
    %v536 = vsel %vm535, 0, %v534
    %v537 = vsub.s32 32, %v536
    %v538 = vshll.u32 %v529, %v536
    %v539 = vshrl.u32 %v521, %v537
    %v540 = vor.u32 %v538, %v539
    %v541 = vsub.s32 4294967266, %v536
    %v542 = vadd.s32 %v541, 127
    %v543 = vshll.u32 %v542, 23
    %v544 = vor.u32 4788187, %v543
    %v545 = vand.u32 2147483647, %v544
    %v547 = vcvt.s32.f32 %v540
    %v548 = vmul.f32 %v547, %v545
    %v549 = vxor.u32 %v548, 2147483648
    %v550 = vsel %vm429, %v549, %v548
    %v551 = vsub.s32 4, %v527
    %v552 = vsel %vm429, %v551, %v527
    %v553 = vsel %vm428, %v115, %v550
    %v554 = vsel %vm428, 0, %v552
    %v555 = vmul.f32 %v553, %v553
    %v556 = vmul.f32 %v555, -0.001358992
    %v557 = vadd.f32 %v556, 0.041655596
    %v558 = vmul.f32 %v555, %v557
    %v559 = vadd.f32 %v558, -0.4999988
    %v560 = vmul.f32 %v555, %v559
    %v561 = vadd.f32 1.0, %v560
    %v562 = vmul.f32 %v553, %v553
    %v563 = vmul.f32 %v562, -0.00019511016
    %v564 = vadd.f32 %v563, 0.008332121
    %v565 = vmul.f32 %v562, %v564
    %v566 = vadd.f32 %v565, -0.16666654
    %v567 = vmul.f32 %v562, %v566
    %v568 = vadd.f32 %v567, 1.0
    %v569 = vmul.f32 %v568, %v553
    %vm570 = vweird.f32 %v115
    %v571 = vadd.s32 %v554, 3
    %v572 = vand.u32 %v571, 3
    %vm573 = vcmp.lt.s32.totalorder %v572, 2
    %vm574 = vcmp.eq.s32.totalorder %v572, 0
    %v575 = vxor.u32 %v569, 2147483648
    %v576 = vsel %vm574, %v561, %v575
    %vm577 = vcmp.eq.s32.totalorder %v572, 2
    %v578 = vxor.u32 %v561, 2147483648
    %v579 = vsel %vm577, %v578, %v569
    %v580 = vsel %vm573, %v576, %v579
    %v581 = vsel %vm570, nan, %v580
    %v582 = vand.u32 2147483647, %v116
    %vm583 = vcmp.le.f32.partialorder %v582, 0.7853982
    %vm584 = vcmp.lt.s32.totalorder %v116, 0
    %v585 = vand.u32 %v116, 2139095040
    %v586 = vshrl.u32 %v585, 23
    %v587 = vsub.s32 %v586, 127
    %v588 = vand.u32 2147483647, %v116
    %v589 = vand.u32 %v588, 8388607
    %v590 = vor.u32 %v589, 8388608
    %v591 = vsub.s32 0, %v590
    %v592 = vadd.s32 %v587, 1
    %vm593 = vcmp.gt.s32.totalorder %v592, 0
    %v594 = vsel %vm593, %v592, 0
    %v595 = vshrl.u32 %v594, 5
    %v596 = vand.u32 %v594, 31
    %v597 = vsub.s32 32, %v596
    %v598 = vshrl.u32 683565275, %v597
    %v599 = vshll.u32 683565275, %v596
    %v600 = vshrl.u32 2475754826, %v597
    %v601 = vor.u32 %v599, %v600
    %v602 = vshll.u32 2475754826, %v596
    %v603 = vshrl.u32 2131351028, %v597
    %v604 = vor.u32 %v602, %v603
    %v605 = vshll.u32 2131351028, %v596
    %v606 = vshrl.u32 2102212464, %v597
    %v607 = vor.u32 %v605, %v606
    %v608 = vshll.u32 2102212464, %v596
    %v609 = vshrl.u32 920167782, %v597
    %v610 = vor.u32 %v608, %v609
    %v611 = vshll.u32 920167782, %v596
    %v612 = vshrl.u32 1326507024, %v597
    %v613 = vor.u32 %v611, %v612
    %vm614 = vcmp.lt.s32.totalorder %v595, 1
    %vm615 = vcmp.lt.s32.totalorder %v595, 2
    %vm616 = vcmp.lt.s32.totalorder %v595, 3
    %vm617 = vcmp.lt.s32.totalorder %v595, 4
    %v618 = vsel %vm614, %v598, %v601
    %v619 = vsel %vm617, %v607, 2102212464
    %v620 = vsel %vm616, %v604, %v619
    %v621 = vsel %vm615, %v618, %v620
    %v622 = vsel %vm614, %v601, %v604
    %v623 = vsel %vm617, %v610, 920167782
    %v624 = vsel %vm616, %v607, %v623
    %v625 = vsel %vm615, %v622, %v624
    %v626 = vsel %vm614, %v604, %v607
    %v627 = vsel %vm617, %v613, 1326507024
    %v628 = vsel %vm616, %v610, %v627
    %v629 = vsel %vm615, %v626, %v628
    %v630 = vshll.u32 %v590, 8
    %v631 = vand.u32 %v630, 65535
    %v632 = vshrl.u32 %v630, 16
    %v633 = vand.u32 %v629, 65535
    %v634 = vshrl.u32 %v629, 16
    %v635 = vmul.u32 %v631, %v633
    %v636 = vmul.u32 %v631, %v634
    %v637 = vmul.u32 %v632, %v633
    %v638 = vmul.u32 %v632, %v634
    %v639 = vshll.u32 %v636, 16
    %v640 = vshrl.u32 %v636, 16
    %v641 = vshll.u32 %v637, 16
    %v642 = vshrl.u32 %v637, 16
    %vm643 = vc.u32 %v635, %v639
    %v644 = vsel %vm643, 1, 0
    %v645 = vadd.s32 %v635, %v639
    %v646 = vadd.s32 %v638, %v644
    %vm647 = vc.u32 %v645, %v641
    %v648 = vsel %vm647, 1, 0
    %v649 = vadd.s32 %v645, %v641
    %v650 = vadd.s32 %v646, %v648
    %v651 = vadd.s32 %v650, %v640
    %v652 = vadd.s32 %v651, %v642
    %v653 = vand.u32 %v630, 65535
    %v654 = vshrl.u32 %v630, 16
    %v655 = vand.u32 %v625, 65535
    %v656 = vshrl.u32 %v625, 16
    %v657 = vmul.u32 %v653, %v655
    %v658 = vmul.u32 %v653, %v656
    %v659 = vmul.u32 %v654, %v655
    %v660 = vmul.u32 %v654, %v656
    %v661 = vshll.u32 %v658, 16
    %v662 = vshrl.u32 %v658, 16
    %v663 = vshll.u32 %v659, 16
    %v664 = vshrl.u32 %v659, 16
    %vm665 = vc.u32 %v657, %v661
    %v666 = vsel %vm665, 1, 0
    %v667 = vadd.s32 %v657, %v661
    %v668 = vadd.s32 %v660, %v666
    %vm669 = vc.u32 %v667, %v663
    %v670 = vsel %vm669, 1, 0
    %v671 = vadd.s32 %v667, %v663
    %v672 = vadd.s32 %v668, %v670
    %v673 = vadd.s32 %v672, %v662
    %v674 = vadd.s32 %v673, %v664
    %v675 = vmul.u32 %v630, %v621
    %v676 = vadd.s32 %v652, %v671
    %vm677 = vc.u32 %v652, %v671
    %v678 = vadd.s32 %v674, 1
    %v679 = vsel %vm677, %v678, %v674
    %v680 = vadd.s32 %v675, %v679
    %v681 = vadd.s32 %v680, 536870912
    %v682 = vshrl.u32 %v681, 30
    %v683 = vshll.u32 %v682, 30
    %v684 = vsub.s32 %v680, %v683
    %vm685 = vcmp.lt.s32.totalorder %v684, 0
    %v686 = vsub.s32 0, %v684
    %v687 = vsel %vm685, %v686, %v684
    %v688 = vclz %v687
    %v689 = vsub.s32 %v688, 2
    %vm690 = vcmp.gt.s32.totalorder 0, %v689
    %v691 = vsel %vm690, 0, %v689
    %v692 = vsub.s32 32, %v691
    %v693 = vshll.u32 %v684, %v691
    %v694 = vshrl.u32 %v676, %v692
    %v695 = vor.u32 %v693, %v694
    %v696 = vsub.s32 4294967266, %v691
    %v697 = vadd.s32 %v696, 127
    %v698 = vshll.u32 %v697, 23
    %v699 = vor.u32 4788187, %v698
    %v700 = vand.u32 2147483647, %v699
    %v702 = vcvt.s32.f32 %v695
    %v703 = vmul.f32 %v702, %v700
    %v704 = vxor.u32 %v703, 2147483648
    %v705 = vsel %vm584, %v704, %v703
    %v706 = vsub.s32 4, %v682
    %v707 = vsel %vm584, %v706, %v682
    %v708 = vsel %vm583, %v116, %v705
    %v709 = vsel %vm583, 0, %v707
    %v710 = vmul.f32 %v708, %v708
    %v711 = vmul.f32 %v710, -0.001358992
    %v712 = vadd.f32 %v711, 0.041655596
    %v713 = vmul.f32 %v710, %v712
    %v714 = vadd.f32 %v713, -0.4999988
    %v715 = vmul.f32 %v710, %v714
    %v716 = vadd.f32 1.0, %v715
    %v717 = vmul.f32 %v708, %v708
    %v718 = vmul.f32 %v717, -0.00019511016
    %v719 = vadd.f32 %v718, 0.008332121
    %v720 = vmul.f32 %v717, %v719
    %v721 = vadd.f32 %v720, -0.16666654
    %v722 = vmul.f32 %v717, %v721
    %v723 = vadd.f32 %v722, 1.0
    %v724 = vmul.f32 %v723, %v708
    %vm725 = vweird.f32 %v116
    %v726 = vadd.s32 %v709, 3
    %v727 = vand.u32 %v726, 3
    %vm728 = vcmp.lt.s32.totalorder %v727, 2
    %vm729 = vcmp.eq.s32.totalorder %v727, 0
    %v730 = vxor.u32 %v724, 2147483648
    %v731 = vsel %vm729, %v716, %v730
    %vm732 = vcmp.eq.s32.totalorder %v727, 2
    %v733 = vxor.u32 %v716, 2147483648
    %v734 = vsel %vm732, %v733, %v724
    %v735 = vsel %vm728, %v731, %v734
    %v736 = vsel %vm725, nan, %v735
    %v737 = vand.u32 2147483647, %v113
    %vm738 = vcmp.le.f32.partialorder %v737, 0.7853982
    %vm739 = vcmp.lt.s32.totalorder %v113, 0
    %v740 = vand.u32 %v113, 2139095040
    %v741 = vshrl.u32 %v740, 23
    %v742 = vsub.s32 %v741, 127
    %v743 = vand.u32 2147483647, %v113
    %v744 = vand.u32 %v743, 8388607
    %v745 = vor.u32 %v744, 8388608
    %v746 = vsub.s32 0, %v745
    %v747 = vadd.s32 %v742, 1
    %vm748 = vcmp.gt.s32.totalorder %v747, 0
    %v749 = vsel %vm748, %v747, 0
    %v750 = vshrl.u32 %v749, 5
    %v751 = vand.u32 %v749, 31
    %v752 = vsub.s32 32, %v751
    %v753 = vshrl.u32 683565275, %v752
    %v754 = vshll.u32 683565275, %v751
    %v755 = vshrl.u32 2475754826, %v752
    %v756 = vor.u32 %v754, %v755
    %v757 = vshll.u32 2475754826, %v751
    %v758 = vshrl.u32 2131351028, %v752
    %v759 = vor.u32 %v757, %v758
    %v760 = vshll.u32 2131351028, %v751
    %v761 = vshrl.u32 2102212464, %v752
    %v762 = vor.u32 %v760, %v761
    %v763 = vshll.u32 2102212464, %v751
    %v764 = vshrl.u32 920167782, %v752
    %v765 = vor.u32 %v763, %v764
    %v766 = vshll.u32 920167782, %v751
    %v767 = vshrl.u32 1326507024, %v752
    %v768 = vor.u32 %v766, %v767
    %vm769 = vcmp.lt.s32.totalorder %v750, 1
    %vm770 = vcmp.lt.s32.totalorder %v750, 2
    %vm771 = vcmp.lt.s32.totalorder %v750, 3
    %vm772 = vcmp.lt.s32.totalorder %v750, 4
    %v773 = vsel %vm769, %v753, %v756
    %v774 = vsel %vm772, %v762, 2102212464
    %v775 = vsel %vm771, %v759, %v774
    %v776 = vsel %vm770, %v773, %v775
    %v777 = vsel %vm769, %v756, %v759
    %v778 = vsel %vm772, %v765, 920167782
    %v779 = vsel %vm771, %v762, %v778
    %v780 = vsel %vm770, %v777, %v779
    %v781 = vsel %vm769, %v759, %v762
    %v782 = vsel %vm772, %v768, 1326507024
    %v783 = vsel %vm771, %v765, %v782
    %v784 = vsel %vm770, %v781, %v783
    %v785 = vshll.u32 %v745, 8
    %v786 = vand.u32 %v785, 65535
    %v787 = vshrl.u32 %v785, 16
    %v788 = vand.u32 %v784, 65535
    %v789 = vshrl.u32 %v784, 16
    %v790 = vmul.u32 %v786, %v788
    %v791 = vmul.u32 %v786, %v789
    %v792 = vmul.u32 %v787, %v788
    %v793 = vmul.u32 %v787, %v789
    %v794 = vshll.u32 %v791, 16
    %v795 = vshrl.u32 %v791, 16
    %v796 = vshll.u32 %v792, 16
    %v797 = vshrl.u32 %v792, 16
    %vm798 = vc.u32 %v790, %v794
    %v799 = vsel %vm798, 1, 0
    %v800 = vadd.s32 %v790, %v794
    %v801 = vadd.s32 %v793, %v799
    %vm802 = vc.u32 %v800, %v796
    %v803 = vsel %vm802, 1, 0
    %v804 = vadd.s32 %v800, %v796
    %v805 = vadd.s32 %v801, %v803
    %v806 = vadd.s32 %v805, %v795
    %v807 = vadd.s32 %v806, %v797
    %v808 = vand.u32 %v785, 65535
    %v809 = vshrl.u32 %v785, 16
    %v810 = vand.u32 %v780, 65535
    %v811 = vshrl.u32 %v780, 16
    %v812 = vmul.u32 %v808, %v810
    %v813 = vmul.u32 %v808, %v811
    %v814 = vmul.u32 %v809, %v810
    %v815 = vmul.u32 %v809, %v811
    %v816 = vshll.u32 %v813, 16
    %v817 = vshrl.u32 %v813, 16
    %v818 = vshll.u32 %v814, 16
    %v819 = vshrl.u32 %v814, 16
    %vm820 = vc.u32 %v812, %v816
    %v821 = vsel %vm820, 1, 0
    %v822 = vadd.s32 %v812, %v816
    %v823 = vadd.s32 %v815, %v821
    %vm824 = vc.u32 %v822, %v818
    %v825 = vsel %vm824, 1, 0
    %v826 = vadd.s32 %v822, %v818
    %v827 = vadd.s32 %v823, %v825
    %v828 = vadd.s32 %v827, %v817
    %v829 = vadd.s32 %v828, %v819
    %v830 = vmul.u32 %v785, %v776
    %v831 = vadd.s32 %v807, %v826
    %vm832 = vc.u32 %v807, %v826
    %v833 = vadd.s32 %v829, 1
    %v834 = vsel %vm832, %v833, %v829
    %v835 = vadd.s32 %v830, %v834
    %v836 = vadd.s32 %v835, 536870912
    %v837 = vshrl.u32 %v836, 30
    %v838 = vshll.u32 %v837, 30
    %v839 = vsub.s32 %v835, %v838
    %vm840 = vcmp.lt.s32.totalorder %v839, 0
    %v841 = vsub.s32 0, %v839
    %v842 = vsel %vm840, %v841, %v839
    %v843 = vclz %v842
    %v844 = vsub.s32 %v843, 2
    %vm845 = vcmp.gt.s32.totalorder 0, %v844
    %v846 = vsel %vm845, 0, %v844
    %v847 = vsub.s32 32, %v846
    %v848 = vshll.u32 %v839, %v846
    %v849 = vshrl.u32 %v831, %v847
    %v850 = vor.u32 %v848, %v849
    %v851 = vsub.s32 4294967266, %v846
    %v852 = vadd.s32 %v851, 127
    %v853 = vshll.u32 %v852, 23
    %v854 = vor.u32 4788187, %v853
    %v855 = vand.u32 2147483647, %v854
    %v857 = vcvt.s32.f32 %v850
    %v858 = vmul.f32 %v857, %v855
    %v859 = vxor.u32 %v858, 2147483648
    %v860 = vsel %vm739, %v859, %v858
    %v861 = vsub.s32 4, %v837
    %v862 = vsel %vm739, %v861, %v837
    %v863 = vsel %vm738, %v113, %v860
    %v864 = vsel %vm738, 0, %v862
    %v865 = vmul.f32 %v863, %v863
    %v866 = vmul.f32 %v865, -0.001358992
    %v867 = vadd.f32 %v866, 0.041655596
    %v868 = vmul.f32 %v865, %v867
    %v869 = vadd.f32 %v868, -0.4999988
    %v870 = vmul.f32 %v865, %v869
    %v871 = vadd.f32 1.0, %v870
    %v872 = vmul.f32 %v863, %v863
    %v873 = vmul.f32 %v872, -0.00019511016
    %v874 = vadd.f32 %v873, 0.008332121
    %v875 = vmul.f32 %v872, %v874
    %v876 = vadd.f32 %v875, -0.16666654
    %v877 = vmul.f32 %v872, %v876
    %v878 = vadd.f32 %v877, 1.0
    %v879 = vmul.f32 %v878, %v863
    %vm880 = vweird.f32 %v113
    %v881 = vand.u32 %v864, 3
    %vm882 = vcmp.lt.s32.totalorder %v881, 2
    %vm883 = vcmp.eq.s32.totalorder %v881, 0
    %v884 = vxor.u32 %v879, 2147483648
    %v885 = vsel %vm883, %v871, %v884
    %vm886 = vcmp.eq.s32.totalorder %v881, 2
    %v887 = vxor.u32 %v871, 2147483648
    %v888 = vsel %vm886, %v887, %v879
    %v889 = vsel %vm882, %v885, %v888
    %v890 = vsel %vm880, nan, %v889
    %v891 = vand.u32 2147483647, %v114
    %vm892 = vcmp.le.f32.partialorder %v891, 0.7853982
    %vm893 = vcmp.lt.s32.totalorder %v114, 0
    %v894 = vand.u32 %v114, 2139095040
    %v895 = vshrl.u32 %v894, 23
    %v896 = vsub.s32 %v895, 127
    %v897 = vand.u32 2147483647, %v114
    %v898 = vand.u32 %v897, 8388607
    %v899 = vor.u32 %v898, 8388608
    %v900 = vsub.s32 0, %v899
    %v901 = vadd.s32 %v896, 1
    %vm902 = vcmp.gt.s32.totalorder %v901, 0
    %v903 = vsel %vm902, %v901, 0
    %v904 = vshrl.u32 %v903, 5
    %v905 = vand.u32 %v903, 31
    %v906 = vsub.s32 32, %v905
    %v907 = vshrl.u32 683565275, %v906
    %v908 = vshll.u32 683565275, %v905
    %v909 = vshrl.u32 2475754826, %v906
    %v910 = vor.u32 %v908, %v909
    %v911 = vshll.u32 2475754826, %v905
    %v912 = vshrl.u32 2131351028, %v906
    %v913 = vor.u32 %v911, %v912
    %v914 = vshll.u32 2131351028, %v905
    %v915 = vshrl.u32 2102212464, %v906
    %v916 = vor.u32 %v914, %v915
    %v917 = vshll.u32 2102212464, %v905
    %v918 = vshrl.u32 920167782, %v906
    %v919 = vor.u32 %v917, %v918
    %v920 = vshll.u32 920167782, %v905
    %v921 = vshrl.u32 1326507024, %v906
    %v922 = vor.u32 %v920, %v921
    %vm923 = vcmp.lt.s32.totalorder %v904, 1
    %vm924 = vcmp.lt.s32.totalorder %v904, 2
    %vm925 = vcmp.lt.s32.totalorder %v904, 3
    %vm926 = vcmp.lt.s32.totalorder %v904, 4
    %v927 = vsel %vm923, %v907, %v910
    %v928 = vsel %vm926, %v916, 2102212464
    %v929 = vsel %vm925, %v913, %v928
    %v930 = vsel %vm924, %v927, %v929
    %v931 = vsel %vm923, %v910, %v913
    %v932 = vsel %vm926, %v919, 920167782
    %v933 = vsel %vm925, %v916, %v932
    %v934 = vsel %vm924, %v931, %v933
    %v935 = vsel %vm923, %v913, %v916
    %v936 = vsel %vm926, %v922, 1326507024
    %v937 = vsel %vm925, %v919, %v936
    %v938 = vsel %vm924, %v935, %v937
    %v939 = vshll.u32 %v899, 8
    %v940 = vand.u32 %v939, 65535
    %v941 = vshrl.u32 %v939, 16
    %v942 = vand.u32 %v938, 65535
    %v943 = vshrl.u32 %v938, 16
    %v944 = vmul.u32 %v940, %v942
    %v945 = vmul.u32 %v940, %v943
    %v946 = vmul.u32 %v941, %v942
    %v947 = vmul.u32 %v941, %v943
    %v948 = vshll.u32 %v945, 16
    %v949 = vshrl.u32 %v945, 16
    %v950 = vshll.u32 %v946, 16
    %v951 = vshrl.u32 %v946, 16
    %vm952 = vc.u32 %v944, %v948
    %v953 = vsel %vm952, 1, 0
    %v954 = vadd.s32 %v944, %v948
    %v955 = vadd.s32 %v947, %v953
    %vm956 = vc.u32 %v954, %v950
    %v957 = vsel %vm956, 1, 0
    %v958 = vadd.s32 %v954, %v950
    %v959 = vadd.s32 %v955, %v957
    %v960 = vadd.s32 %v959, %v949
    %v961 = vadd.s32 %v960, %v951
    %v962 = vand.u32 %v939, 65535
    %v963 = vshrl.u32 %v939, 16
    %v964 = vand.u32 %v934, 65535
    %v965 = vshrl.u32 %v934, 16
    %v966 = vmul.u32 %v962, %v964
    %v967 = vmul.u32 %v962, %v965
    %v968 = vmul.u32 %v963, %v964
    %v969 = vmul.u32 %v963, %v965
    %v970 = vshll.u32 %v967, 16
    %v971 = vshrl.u32 %v967, 16
    %v972 = vshll.u32 %v968, 16
    %v973 = vshrl.u32 %v968, 16
    %vm974 = vc.u32 %v966, %v970
    %v975 = vsel %vm974, 1, 0
    %v976 = vadd.s32 %v966, %v970
    %v977 = vadd.s32 %v969, %v975
    %vm978 = vc.u32 %v976, %v972
    %v979 = vsel %vm978, 1, 0
    %v980 = vadd.s32 %v976, %v972
    %v981 = vadd.s32 %v977, %v979
    %v982 = vadd.s32 %v981, %v971
    %v983 = vadd.s32 %v982, %v973
    %v984 = vmul.u32 %v939, %v930
    %v985 = vadd.s32 %v961, %v980
    %vm986 = vc.u32 %v961, %v980
    %v987 = vadd.s32 %v983, 1
    %v988 = vsel %vm986, %v987, %v983
    %v989 = vadd.s32 %v984, %v988
    %v990 = vadd.s32 %v989, 536870912
    %v991 = vshrl.u32 %v990, 30
    %v992 = vshll.u32 %v991, 30
    %v993 = vsub.s32 %v989, %v992
    %vm994 = vcmp.lt.s32.totalorder %v993, 0
    %v995 = vsub.s32 0, %v993
    %v996 = vsel %vm994, %v995, %v993
    %v997 = vclz %v996
    %v998 = vsub.s32 %v997, 2
    %vm999 = vcmp.gt.s32.totalorder 0, %v998
    %v1000 = vsel %vm999, 0, %v998
    %v1001 = vsub.s32 32, %v1000
    %v1002 = vshll.u32 %v993, %v1000
    %v1003 = vshrl.u32 %v985, %v1001
    %v1004 = vor.u32 %v1002, %v1003
    %v1005 = vsub.s32 4294967266, %v1000
    %v1006 = vadd.s32 %v1005, 127
    %v1007 = vshll.u32 %v1006, 23
    %v1008 = vor.u32 4788187, %v1007
    %v1009 = vand.u32 2147483647, %v1008
    %v1011 = vcvt.s32.f32 %v1004
    %v1012 = vmul.f32 %v1011, %v1009
    %v1013 = vxor.u32 %v1012, 2147483648
    %v1014 = vsel %vm893, %v1013, %v1012
    %v1015 = vsub.s32 4, %v991
    %v1016 = vsel %vm893, %v1015, %v991
    %v1017 = vsel %vm892, %v114, %v1014
    %v1018 = vsel %vm892, 0, %v1016
    %v1019 = vmul.f32 %v1017, %v1017
    %v1020 = vmul.f32 %v1019, -0.001358992
    %v1021 = vadd.f32 %v1020, 0.041655596
    %v1022 = vmul.f32 %v1019, %v1021
    %v1023 = vadd.f32 %v1022, -0.4999988
    %v1024 = vmul.f32 %v1019, %v1023
    %v1025 = vadd.f32 1.0, %v1024
    %v1026 = vmul.f32 %v1017, %v1017
    %v1027 = vmul.f32 %v1026, -0.00019511016
    %v1028 = vadd.f32 %v1027, 0.008332121
    %v1029 = vmul.f32 %v1026, %v1028
    %v1030 = vadd.f32 %v1029, -0.16666654
    %v1031 = vmul.f32 %v1026, %v1030
    %v1032 = vadd.f32 %v1031, 1.0
    %v1033 = vmul.f32 %v1032, %v1017
    %vm1034 = vweird.f32 %v114
    %v1035 = vand.u32 %v1018, 3
    %vm1036 = vcmp.lt.s32.totalorder %v1035, 2
    %vm1037 = vcmp.eq.s32.totalorder %v1035, 0
    %v1038 = vxor.u32 %v1033, 2147483648
    %v1039 = vsel %vm1037, %v1025, %v1038
    %vm1040 = vcmp.eq.s32.totalorder %v1035, 2
    %v1041 = vxor.u32 %v1025, 2147483648
    %v1042 = vsel %vm1040, %v1041, %v1033
    %v1043 = vsel %vm1036, %v1039, %v1042
    %v1044 = vsel %vm1034, nan, %v1043
    %v1045 = vand.u32 2147483647, %v115
    %vm1046 = vcmp.le.f32.partialorder %v1045, 0.7853982
    %vm1047 = vcmp.lt.s32.totalorder %v115, 0
    %v1048 = vand.u32 %v115, 2139095040
    %v1049 = vshrl.u32 %v1048, 23
    %v1050 = vsub.s32 %v1049, 127
    %v1051 = vand.u32 2147483647, %v115
    %v1052 = vand.u32 %v1051, 8388607
    %v1053 = vor.u32 %v1052, 8388608
    %v1054 = vsub.s32 0, %v1053
    %v1055 = vadd.s32 %v1050, 1
    %vm1056 = vcmp.gt.s32.totalorder %v1055, 0
    %v1057 = vsel %vm1056, %v1055, 0
    %v1058 = vshrl.u32 %v1057, 5
    %v1059 = vand.u32 %v1057, 31
    %v1060 = vsub.s32 32, %v1059
    %v1061 = vshrl.u32 683565275, %v1060
    %v1062 = vshll.u32 683565275, %v1059
    %v1063 = vshrl.u32 2475754826, %v1060
    %v1064 = vor.u32 %v1062, %v1063
    %v1065 = vshll.u32 2475754826, %v1059
    %v1066 = vshrl.u32 2131351028, %v1060
    %v1067 = vor.u32 %v1065, %v1066
    %v1068 = vshll.u32 2131351028, %v1059
    %v1069 = vshrl.u32 2102212464, %v1060
    %v1070 = vor.u32 %v1068, %v1069
    %v1071 = vshll.u32 2102212464, %v1059
    %v1072 = vshrl.u32 920167782, %v1060
    %v1073 = vor.u32 %v1071, %v1072
    %v1074 = vshll.u32 920167782, %v1059
    %v1075 = vshrl.u32 1326507024, %v1060
    %v1076 = vor.u32 %v1074, %v1075
    %vm1077 = vcmp.lt.s32.totalorder %v1058, 1
    %vm1078 = vcmp.lt.s32.totalorder %v1058, 2
    %vm1079 = vcmp.lt.s32.totalorder %v1058, 3
    %vm1080 = vcmp.lt.s32.totalorder %v1058, 4
    %v1081 = vsel %vm1077, %v1061, %v1064
    %v1082 = vsel %vm1080, %v1070, 2102212464
    %v1083 = vsel %vm1079, %v1067, %v1082
    %v1084 = vsel %vm1078, %v1081, %v1083
    %v1085 = vsel %vm1077, %v1064, %v1067
    %v1086 = vsel %vm1080, %v1073, 920167782
    %v1087 = vsel %vm1079, %v1070, %v1086
    %v1088 = vsel %vm1078, %v1085, %v1087
    %v1089 = vsel %vm1077, %v1067, %v1070
    %v1090 = vsel %vm1080, %v1076, 1326507024
    %v1091 = vsel %vm1079, %v1073, %v1090
    %v1092 = vsel %vm1078, %v1089, %v1091
    %v1093 = vshll.u32 %v1053, 8
    %v1094 = vand.u32 %v1093, 65535
    %v1095 = vshrl.u32 %v1093, 16
    %v1096 = vand.u32 %v1092, 65535
    %v1097 = vshrl.u32 %v1092, 16
    %v1098 = vmul.u32 %v1094, %v1096
    %v1099 = vmul.u32 %v1094, %v1097
    %v1100 = vmul.u32 %v1095, %v1096
    %v1101 = vmul.u32 %v1095, %v1097
    %v1102 = vshll.u32 %v1099, 16
    %v1103 = vshrl.u32 %v1099, 16
    %v1104 = vshll.u32 %v1100, 16
    %v1105 = vshrl.u32 %v1100, 16
    %vm1106 = vc.u32 %v1098, %v1102
    %v1107 = vsel %vm1106, 1, 0
    %v1108 = vadd.s32 %v1098, %v1102
    %v1109 = vadd.s32 %v1101, %v1107
    %vm1110 = vc.u32 %v1108, %v1104
    %v1111 = vsel %vm1110, 1, 0
    %v1112 = vadd.s32 %v1108, %v1104
    %v1113 = vadd.s32 %v1109, %v1111
    %v1114 = vadd.s32 %v1113, %v1103
    %v1115 = vadd.s32 %v1114, %v1105
    %v1116 = vand.u32 %v1093, 65535
    %v1117 = vshrl.u32 %v1093, 16
    %v1118 = vand.u32 %v1088, 65535
    %v1119 = vshrl.u32 %v1088, 16
    %v1120 = vmul.u32 %v1116, %v1118
    %v1121 = vmul.u32 %v1116, %v1119
    %v1122 = vmul.u32 %v1117, %v1118
    %v1123 = vmul.u32 %v1117, %v1119
    %v1124 = vshll.u32 %v1121, 16
    %v1125 = vshrl.u32 %v1121, 16
    %v1126 = vshll.u32 %v1122, 16
    %v1127 = vshrl.u32 %v1122, 16
    %vm1128 = vc.u32 %v1120, %v1124
    %v1129 = vsel %vm1128, 1, 0
    %v1130 = vadd.s32 %v1120, %v1124
    %v1131 = vadd.s32 %v1123, %v1129
    %vm1132 = vc.u32 %v1130, %v1126
    %v1133 = vsel %vm1132, 1, 0
    %v1134 = vadd.s32 %v1130, %v1126
    %v1135 = vadd.s32 %v1131, %v1133
    %v1136 = vadd.s32 %v1135, %v1125
    %v1137 = vadd.s32 %v1136, %v1127
    %v1138 = vmul.u32 %v1093, %v1084
    %v1139 = vadd.s32 %v1115, %v1134
    %vm1140 = vc.u32 %v1115, %v1134
    %v1141 = vadd.s32 %v1137, 1
    %v1142 = vsel %vm1140, %v1141, %v1137
    %v1143 = vadd.s32 %v1138, %v1142
    %v1144 = vadd.s32 %v1143, 536870912
    %v1145 = vshrl.u32 %v1144, 30
    %v1146 = vshll.u32 %v1145, 30
    %v1147 = vsub.s32 %v1143, %v1146
    %vm1148 = vcmp.lt.s32.totalorder %v1147, 0
    %v1149 = vsub.s32 0, %v1147
    %v1150 = vsel %vm1148, %v1149, %v1147
    %v1151 = vclz %v1150
    %v1152 = vsub.s32 %v1151, 2
    %vm1153 = vcmp.gt.s32.totalorder 0, %v1152
    %v1154 = vsel %vm1153, 0, %v1152
    %v1155 = vsub.s32 32, %v1154
    %v1156 = vshll.u32 %v1147, %v1154
    %v1157 = vshrl.u32 %v1139, %v1155
    %v1158 = vor.u32 %v1156, %v1157
    %v1159 = vsub.s32 4294967266, %v1154
    %v1160 = vadd.s32 %v1159, 127
    %v1161 = vshll.u32 %v1160, 23
    %v1162 = vor.u32 4788187, %v1161
    %v1163 = vand.u32 2147483647, %v1162
    %v1165 = vcvt.s32.f32 %v1158
    %v1166 = vmul.f32 %v1165, %v1163
    %v1167 = vxor.u32 %v1166, 2147483648
    %v1168 = vsel %vm1047, %v1167, %v1166
    %v1169 = vsub.s32 4, %v1145
    %v1170 = vsel %vm1047, %v1169, %v1145
    %v1171 = vsel %vm1046, %v115, %v1168
    %v1172 = vsel %vm1046, 0, %v1170
    %v1173 = vmul.f32 %v1171, %v1171
    %v1174 = vmul.f32 %v1173, -0.001358992
    %v1175 = vadd.f32 %v1174, 0.041655596
    %v1176 = vmul.f32 %v1173, %v1175
    %v1177 = vadd.f32 %v1176, -0.4999988
    %v1178 = vmul.f32 %v1173, %v1177
    %v1179 = vadd.f32 1.0, %v1178
    %v1180 = vmul.f32 %v1171, %v1171
    %v1181 = vmul.f32 %v1180, -0.00019511016
    %v1182 = vadd.f32 %v1181, 0.008332121
    %v1183 = vmul.f32 %v1180, %v1182
    %v1184 = vadd.f32 %v1183, -0.16666654
    %v1185 = vmul.f32 %v1180, %v1184
    %v1186 = vadd.f32 %v1185, 1.0
    %v1187 = vmul.f32 %v1186, %v1171
    %vm1188 = vweird.f32 %v115
    %v1189 = vand.u32 %v1172, 3
    %vm1190 = vcmp.lt.s32.totalorder %v1189, 2
    %vm1191 = vcmp.eq.s32.totalorder %v1189, 0
    %v1192 = vxor.u32 %v1187, 2147483648
    %v1193 = vsel %vm1191, %v1179, %v1192
    %vm1194 = vcmp.eq.s32.totalorder %v1189, 2
    %v1195 = vxor.u32 %v1179, 2147483648
    %v1196 = vsel %vm1194, %v1195, %v1187
    %v1197 = vsel %vm1190, %v1193, %v1196
    %v1198 = vsel %vm1188, nan, %v1197
    %v1199 = vand.u32 2147483647, %v116
    %vm1200 = vcmp.le.f32.partialorder %v1199, 0.7853982
    %vm1201 = vcmp.lt.s32.totalorder %v116, 0
    %v1202 = vand.u32 %v116, 2139095040
    %v1203 = vshrl.u32 %v1202, 23
    %v1204 = vsub.s32 %v1203, 127
    %v1205 = vand.u32 2147483647, %v116
    %v1206 = vand.u32 %v1205, 8388607
    %v1207 = vor.u32 %v1206, 8388608
    %v1208 = vsub.s32 0, %v1207
    %v1209 = vadd.s32 %v1204, 1
    %vm1210 = vcmp.gt.s32.totalorder %v1209, 0
    %v1211 = vsel %vm1210, %v1209, 0
    %v1212 = vshrl.u32 %v1211, 5
    %v1213 = vand.u32 %v1211, 31
    %v1214 = vsub.s32 32, %v1213
    %v1215 = vshrl.u32 683565275, %v1214
    %v1216 = vshll.u32 683565275, %v1213
    %v1217 = vshrl.u32 2475754826, %v1214
    %v1218 = vor.u32 %v1216, %v1217
    %v1219 = vshll.u32 2475754826, %v1213
    %v1220 = vshrl.u32 2131351028, %v1214
    %v1221 = vor.u32 %v1219, %v1220
    %v1222 = vshll.u32 2131351028, %v1213
    %v1223 = vshrl.u32 2102212464, %v1214
    %v1224 = vor.u32 %v1222, %v1223
    %v1225 = vshll.u32 2102212464, %v1213
    %v1226 = vshrl.u32 920167782, %v1214
    %v1227 = vor.u32 %v1225, %v1226
    %v1228 = vshll.u32 920167782, %v1213
    %v1229 = vshrl.u32 1326507024, %v1214
    %v1230 = vor.u32 %v1228, %v1229
    %vm1231 = vcmp.lt.s32.totalorder %v1212, 1
    %vm1232 = vcmp.lt.s32.totalorder %v1212, 2
    %vm1233 = vcmp.lt.s32.totalorder %v1212, 3
    %vm1234 = vcmp.lt.s32.totalorder %v1212, 4
    %v1235 = vsel %vm1231, %v1215, %v1218
    %v1236 = vsel %vm1234, %v1224, 2102212464
    %v1237 = vsel %vm1233, %v1221, %v1236
    %v1238 = vsel %vm1232, %v1235, %v1237
    %v1239 = vsel %vm1231, %v1218, %v1221
    %v1240 = vsel %vm1234, %v1227, 920167782
    %v1241 = vsel %vm1233, %v1224, %v1240
    %v1242 = vsel %vm1232, %v1239, %v1241
    %v1243 = vsel %vm1231, %v1221, %v1224
    %v1244 = vsel %vm1234, %v1230, 1326507024
    %v1245 = vsel %vm1233, %v1227, %v1244
    %v1246 = vsel %vm1232, %v1243, %v1245
    %v1247 = vshll.u32 %v1207, 8
    %v1248 = vand.u32 %v1247, 65535
    %v1249 = vshrl.u32 %v1247, 16
    %v1250 = vand.u32 %v1246, 65535
    %v1251 = vshrl.u32 %v1246, 16
    %v1252 = vmul.u32 %v1248, %v1250
    %v1253 = vmul.u32 %v1248, %v1251
    %v1254 = vmul.u32 %v1249, %v1250
    %v1255 = vmul.u32 %v1249, %v1251
    %v1256 = vshll.u32 %v1253, 16
    %v1257 = vshrl.u32 %v1253, 16
    %v1258 = vshll.u32 %v1254, 16
    %v1259 = vshrl.u32 %v1254, 16
    %vm1260 = vc.u32 %v1252, %v1256
    %v1261 = vsel %vm1260, 1, 0
    %v1262 = vadd.s32 %v1252, %v1256
    %v1263 = vadd.s32 %v1255, %v1261
    %vm1264 = vc.u32 %v1262, %v1258
    %v1265 = vsel %vm1264, 1, 0
    %v1266 = vadd.s32 %v1262, %v1258
    %v1267 = vadd.s32 %v1263, %v1265
    %v1268 = vadd.s32 %v1267, %v1257
    %v1269 = vadd.s32 %v1268, %v1259
    %v1270 = vand.u32 %v1247, 65535
    %v1271 = vshrl.u32 %v1247, 16
    %v1272 = vand.u32 %v1242, 65535
    %v1273 = vshrl.u32 %v1242, 16
    %v1274 = vmul.u32 %v1270, %v1272
    %v1275 = vmul.u32 %v1270, %v1273
    %v1276 = vmul.u32 %v1271, %v1272
    %v1277 = vmul.u32 %v1271, %v1273
    %v1278 = vshll.u32 %v1275, 16
    %v1279 = vshrl.u32 %v1275, 16
    %v1280 = vshll.u32 %v1276, 16
    %v1281 = vshrl.u32 %v1276, 16
    %vm1282 = vc.u32 %v1274, %v1278
    %v1283 = vsel %vm1282, 1, 0
    %v1284 = vadd.s32 %v1274, %v1278
    %v1285 = vadd.s32 %v1277, %v1283
    %vm1286 = vc.u32 %v1284, %v1280
    %v1287 = vsel %vm1286, 1, 0
    %v1288 = vadd.s32 %v1284, %v1280
    %v1289 = vadd.s32 %v1285, %v1287
    %v1290 = vadd.s32 %v1289, %v1279
    %v1291 = vadd.s32 %v1290, %v1281
    %v1292 = vmul.u32 %v1247, %v1238
    %v1293 = vadd.s32 %v1269, %v1288
    %vm1294 = vc.u32 %v1269, %v1288
    %v1295 = vadd.s32 %v1291, 1
    %v1296 = vsel %vm1294, %v1295, %v1291
    %v1297 = vadd.s32 %v1292, %v1296
    %v1298 = vadd.s32 %v1297, 536870912
    %v1299 = vshrl.u32 %v1298, 30
    %v1300 = vshll.u32 %v1299, 30
    %v1301 = vsub.s32 %v1297, %v1300
    %vm1302 = vcmp.lt.s32.totalorder %v1301, 0
    %v1303 = vsub.s32 0, %v1301
    %v1304 = vsel %vm1302, %v1303, %v1301
    %v1305 = vclz %v1304
    %v1306 = vsub.s32 %v1305, 2
    %vm1307 = vcmp.gt.s32.totalorder 0, %v1306
    %v1308 = vsel %vm1307, 0, %v1306
    %v1309 = vsub.s32 32, %v1308
    %v1310 = vshll.u32 %v1301, %v1308
    %v1311 = vshrl.u32 %v1293, %v1309
    %v1312 = vor.u32 %v1310, %v1311
    %v1313 = vsub.s32 4294967266, %v1308
    %v1314 = vadd.s32 %v1313, 127
    %v1315 = vshll.u32 %v1314, 23
    %v1316 = vor.u32 4788187, %v1315
    %v1317 = vand.u32 2147483647, %v1316
    %v1319 = vcvt.s32.f32 %v1312
    %v1320 = vmul.f32 %v1319, %v1317
    %v1321 = vxor.u32 %v1320, 2147483648
    %v1322 = vsel %vm1201, %v1321, %v1320
    %v1323 = vsub.s32 4, %v1299
    %v1324 = vsel %vm1201, %v1323, %v1299
    %v1325 = vsel %vm1200, %v116, %v1322
    %v1326 = vsel %vm1200, 0, %v1324
    %v1327 = vmul.f32 %v1325, %v1325
    %v1328 = vmul.f32 %v1327, -0.001358992
    %v1329 = vadd.f32 %v1328, 0.041655596
    %v1330 = vmul.f32 %v1327, %v1329
    %v1331 = vadd.f32 %v1330, -0.4999988
    %v1332 = vmul.f32 %v1327, %v1331
    %v1333 = vadd.f32 1.0, %v1332
    %v1334 = vmul.f32 %v1325, %v1325
    %v1335 = vmul.f32 %v1334, -0.00019511016
    %v1336 = vadd.f32 %v1335, 0.008332121
    %v1337 = vmul.f32 %v1334, %v1336
    %v1338 = vadd.f32 %v1337, -0.16666654
    %v1339 = vmul.f32 %v1334, %v1338
    %v1340 = vadd.f32 %v1339, 1.0
    %v1341 = vmul.f32 %v1340, %v1325
    %vm1342 = vweird.f32 %v116
    %v1343 = vand.u32 %v1326, 3
    %vm1344 = vcmp.lt.s32.totalorder %v1343, 2
    %vm1345 = vcmp.eq.s32.totalorder %v1343, 0
    %v1346 = vxor.u32 %v1341, 2147483648
    %v1347 = vsel %vm1345, %v1333, %v1346
    %vm1348 = vcmp.eq.s32.totalorder %v1343, 2
    %v1349 = vxor.u32 %v1333, 2147483648
    %v1350 = vsel %vm1348, %v1349, %v1341
    %v1351 = vsel %vm1344, %v1347, %v1350
    %v1352 = vsel %vm1342, nan, %v1351
    %1353 = vst [vmem:[#allocation2] sm:$0xff] %v271
    %1354 = vst [vmem:[#allocation2 + $0x10] sm:$0xff] %v426
    %1355 = vst [vmem:[#allocation2 + $0x20] sm:$0xff] %v581
    %1356 = vst [vmem:[#allocation2 + $0x30] sm:$0xff] %v736
    %1357 = vst [vmem:[#allocation2 + $0x8] sm:$0xff] %v890
    %1358 = vst [vmem:[#allocation2 + $0x18] sm:$0xff] %v1044
    %1359 = vst [vmem:[#allocation2 + $0x28] sm:$0xff] %v1198
    %1360 = vst [vmem:[#allocation2 + $0x38] sm:$0xff] %v1352
    // Predicated region
    $region10: #{tpu_custom_call.1} parent=1 // pred_check
      _
    $region11: #{tpu_custom_call.1} parent=1 // pred_check_branch
      %1362 = sbr.rel (0) target = $region13
    $region12: #{tpu_custom_call.1} parent=1 // pred_region
      %1364 = vsyncadd [#allocation3], 0
      %s1365 = sshll.u32 [#allocation2], 4
      %s1366 = int_to_ptr.vmem [resolvable:$true] %s1365
      %s1367 = sshll.u32 %s2, 4
      %s1368 = int_to_ptr.hbm [resolvable:$true] %s1367
      %1373 = dma.vmem_to_hbm [thread:$0]  %s1366, 1024, %s1368, [#allocation3], 256, 256, 16
    $region13: #{tpu_custom_call.1} parent=1 // pred_fallthru
      _
    // Predicated region
    $region14: #{tpu_custom_call.1} parent=1 // pred_check
      _
    $region15: #{tpu_custom_call.1} parent=1 // pred_check_branch
      %1375 = sbr.rel (0) target = $region17
    $region16: #{tpu_custom_call.1} parent=1 // pred_region
      %1377 = dma.done [#allocation3], 1024
    $region17: #{tpu_custom_call.1} parent=1 // pred_fallthru
      _
    %1378 = vsyncpa [#allocation3], 1

</llo_original>
